<compile_context>
chip_gen: v7x
topology: tpu7x:2x2x1
jax: 0.10.0
libtpu: 0.0.40
codegen_flags: <defaults>
</compile_context>

<pallas_src>
import math

import jax
import jax.numpy as jnp
from jax.experimental import pallas as pl
from jax.experimental.pallas import tpu as pltpu

_LANE = 128


def encode_kernel(x_ref, scale_ref, bias_ref, o_ref):
    # x: (br, F) tile; scale/bias: (1, F) grid-invariant resident params.
    # Fused multiply-add: (x - mean) / std == x * (1/std) + (-mean/std).
    o_ref[...] = (x_ref[...] * scale_ref[...] + bias_ref[...]).astype(o_ref.dtype)


def _sublane_for_itemsize(itemsize):
    return {4: 8, 2: 16, 1: 32}.get(int(itemsize), 8)


def _pick_block_rows(rows, feat, itemsize, *, sublane=8, target=4096,
                     vmem_budget=24 << 20, min_steps=8):
    """Row-tile size: big enough to amortize per-step overhead, small enough to
    keep 2x(in) + 2x(out) double buffers under `vmem_budget`, sublane-aligned,
    and never a single whole-array block (so the parallel grid axis can shard
    across TensorCores)."""
    if rows <= sublane:
        return rows  # full-extent block; always legal
    br = max(sublane, (target // sublane) * sublane)
    # VMEM cap for the four double-buffered (br, feat) slabs.
    max_rows = vmem_budget // (4 * feat * itemsize)
    max_rows = max(sublane, (max_rows // sublane) * sublane)
    br = min(br, max_rows)
    # Encourage >= min_steps grid steps (megacore sharding on v7x).
    per_step = -(-rows // min_steps)                       # ceil(rows / min_steps)
    per_step = max(sublane, -(-per_step // sublane) * sublane)  # round up to sublane
    br = min(br, per_step)
    return br


def series_encode_forward(x, mean_input, std_input, *, target_rows=4096):
    """Pallas implementation of series_encode.forward."""
    orig_shape = x.shape
    F = orig_shape[-1]
    dtype = x.dtype
    itemsize = jnp.dtype(dtype).itemsize
    sublane = _sublane_for_itemsize(itemsize)

    # Per-feature parameters (accept scalars or vectors with extra singleton dims).
    mean = jnp.asarray(mean_input, dtype=jnp.float32).reshape(-1)
    std = jnp.asarray(std_input, dtype=jnp.float32).reshape(-1)
    if mean.size == 1:
        mean = jnp.broadcast_to(mean, (F,))
    if std.size == 1:
        std = jnp.broadcast_to(std, (F,))
    scale = 1.0 / std            # hoisted out of the hot loop
    bias = -mean * scale         # (x - m)/s == x*scale + bias

    xr = x.reshape(-1, F)
    R = xr.shape[0]

    # --- Lane-density handling for the last dim -----------------------------
    pad_f = 0
    if F % _LANE == 0:
        Fk = F
    else:
        k0 = _LANE // math.gcd(F, _LANE)
        if k0 > 1 and R % k0 == 0:
            # Fold k0 rows into the lane axis: (R, F) -> (R//k0, k0*F).
            xr = xr.reshape(R // k0, k0 * F)
            scale = jnp.tile(scale, k0)
            bias = jnp.tile(bias, k0)
            R = R // k0
            Fk = k0 * F
        else:
            # Fallback: pad the feature axis to a multiple of 128.
            pad_f = (-F) % _LANE
            Fk = F + pad_f
            xr = jnp.pad(xr, ((0, 0), (0, pad_f)))
            scale = jnp.pad(scale, (0, pad_f))
            bias = jnp.pad(bias, (0, pad_f))

    scale2 = scale.astype(dtype).reshape(1, Fk)
    bias2 = bias.astype(dtype).reshape(1, Fk)

    br = _pick_block_rows(R, Fk, itemsize, sublane=sublane, target=target_rows)
    grid = (pl.cdiv(R, br),)

    out = pl.pallas_call(
        encode_kernel,
        out_shape=jax.ShapeDtypeStruct((R, Fk), dtype),
        grid_spec=pltpu.PrefetchScalarGridSpec(
            num_scalar_prefetch=0,
            grid=grid,
            in_specs=[
                # Large, lane-dense activation tile streamed over the grid.
                pl.BlockSpec((br, Fk), lambda i: (i, 0)),
                # Grid-invariant parameter blocks: DMA'd once, kept resident.
                pl.BlockSpec((1, Fk), lambda i: (0, 0)),
                pl.BlockSpec((1, Fk), lambda i: (0, 0)),
            ],
            out_specs=pl.BlockSpec((br, Fk), lambda i: (i, 0)),
        ),
        compiler_params=pltpu.CompilerParams(
            dimension_semantics=("parallel",),
            vmem_limit_bytes=32 << 20,
        ),
    )(xr, scale2, bias2)

    if pad_f:
        out = out[:, :F]
    return out.reshape(orig_shape)

# TODO(synk): as a standalone elementwise op this is HBM-roofline-bound; if it
# feeds a downstream Pallas kernel, fuse the multiply-add into that kernel's
# input path instead of a separate pallas_call.


def reference_forward(x, mean_input, std_input):
    """Pure-JAX mirror of the PyTorch forward."""
    m = jnp.asarray(mean_input, dtype=jnp.float32).reshape(-1).astype(x.dtype)
    s = jnp.asarray(std_input, dtype=jnp.float32).reshape(-1).astype(x.dtype)
    return (x - m) / s


if __name__ == "__main__":
    # Small (batch, seq, feature) time-series input; feature=128 is lane-dense.
    batch, seq, feature = 2, 64, 128

    key = jax.random.PRNGKey(0)
    k1, k2, k3 = jax.random.split(key, 3)

    x = jax.random.normal(k1, (batch, seq, feature), jnp.float32) * 3.0 + 1.5
    mean_input = jax.random.normal(k2, (feature,), jnp.float32)
    std_input = jax.random.uniform(k3, (feature,), jnp.float32, 0.5, 2.0)

    out = series_encode_forward(x, mean_input, std_input)
    out = jax.block_until_ready(out)

    ref = reference_forward(x, mean_input, std_input)
    assert out.shape == x.shape
    assert jnp.allclose(out, ref, atol=1e-5, rtol=1e-5), "mismatch vs reference"

    # Also exercise the non-128 feature path (folding / padding fallback).
    f2 = 96
    x2 = jax.random.normal(k1, (4, 24, f2), jnp.float32)
    m2 = jax.random.normal(k2, (f2,), jnp.float32)
    s2 = jax.random.uniform(k3, (f2,), jnp.float32, 0.5, 2.0)
    out2 = jax.block_until_ready(series_encode_forward(x2, m2, s2))
    assert jnp.allclose(out2, reference_forward(x2, m2, s2), atol=1e-5, rtol=1e-5)

    print("KERNEL_OK")
</pallas_src>

<mosaic_0001>
module attributes {stable_mosaic.version = 11 : i64} {
  func.func @encode_kernel(%arg0: i32, %arg1: memref<16x128xf32, #tpu.memory_space<vmem>>, %arg2: memref<1x128xf32, #tpu.memory_space<vmem>>, %arg3: memref<1x128xf32, #tpu.memory_space<vmem>>, %arg4: memref<16x128xf32, #tpu.memory_space<vmem>>) attributes {dimension_semantics = [#tpu.dimension_semantics<parallel>], iteration_bounds = array<i64: 8>, scalar_prefetch = 0 : i64, scratch_operands = 0 : i64, tpu.core_type = #tpu.core_type<tc>, window_params = [{transform_indices = @transform_0, window_bounds = array<i64: 16, 128>}, {pipeline_mode = #tpu.pipeline_mode<synchronous>, transform_indices = @transform_1, window_bounds = array<i64: 1, 128>}, {pipeline_mode = #tpu.pipeline_mode<synchronous>, transform_indices = @transform_2, window_bounds = array<i64: 1, 128>}, {transform_indices = @transform_3, window_bounds = array<i64: 16, 128>}]} {
    %c0 = arith.constant 0 : index
    %c0_0 = arith.constant 0 : index
    %0 = vector.load %arg1[%c0, %c0_0] : memref<16x128xf32, #tpu.memory_space<vmem>>, vector<16x128xf32>
    %c0_1 = arith.constant 0 : index
    %c0_2 = arith.constant 0 : index
    %1 = vector.load %arg2[%c0_1, %c0_2] : memref<1x128xf32, #tpu.memory_space<vmem>>, vector<1x128xf32>
    %2 = vector.broadcast %1 : vector<1x128xf32> to vector<16x128xf32>
    %3 = arith.mulf %0, %2 : vector<16x128xf32>
    %c0_3 = arith.constant 0 : index
    %c0_4 = arith.constant 0 : index
    %4 = vector.load %arg3[%c0_3, %c0_4] : memref<1x128xf32, #tpu.memory_space<vmem>>, vector<1x128xf32>
    %5 = vector.broadcast %4 : vector<1x128xf32> to vector<16x128xf32>
    %6 = arith.addf %3, %5 : vector<16x128xf32>
    %c0_5 = arith.constant 0 : index
    %c0_6 = arith.constant 0 : index
    %7 = vector.load %arg4[%c0_5, %c0_6] : memref<16x128xf32, #tpu.memory_space<vmem>>, vector<16x128xf32>
    tpu.vector_store %arg4[%c0_5, %c0_6], %6 {strides = array<i32>} : memref<16x128xf32, #tpu.memory_space<vmem>>, vector<16x128xf32>,
    return
  }
  func.func @transform_0(%arg0: i32) -> (i32, i32) {
    %c0_i32 = arith.constant 0 : i32
    %c0_i32_0 = arith.constant 0 : i32
    return %arg0, %c0_i32 : i32, i32
  }
  func.func @transform_1(%arg0: i32) -> (i32, i32) {
    %c0_i32 = arith.constant 0 : i32
    %c0_i32_0 = arith.constant 0 : i32
    %c0_i32_1 = arith.constant 0 : i32
    return %c0_i32, %c0_i32_0 : i32, i32
  }
  func.func @transform_2(%arg0: i32) -> (i32, i32) {
    %c0_i32 = arith.constant 0 : i32
    %c0_i32_0 = arith.constant 0 : i32
    %c0_i32_1 = arith.constant 0 : i32
    return %c0_i32, %c0_i32_0 : i32, i32
  }
  func.func @transform_3(%arg0: i32) -> (i32, i32) {
    %c0_i32 = arith.constant 0 : i32
    %c0_i32_0 = arith.constant 0 : i32
    return %arg0, %c0_i32 : i32, i32
  }
}

</mosaic_0001>

<llo_original>
// kernel: tpu_custom_call.1
$region0: #{tpu_custom_call.1}
  #allocation0 [shape = 'u32[]', space=smem, size = 0x4, offset = 0x4, fixed_abs, tag = 'smem constant byte address 0x4 - core index']
  #allocation1 [shape = 'u32[144,128]{1,0:T(1,128)}', space=vmem, size = 0x12000, scoped, tag = 'internal scratch']
  %s0 = inlined_call_operand.hbm [shape: f32[128,128], index: 0, kind: input, shape index: {}]
  %s1 = inlined_call_operand.vmem [shape: f32[1,128], index: 1, kind: input, shape index: {}]
  %s2 = inlined_call_operand.vmem [shape: f32[1,128], index: 2, kind: input, shape index: {}]
  %s3 = inlined_call_operand.hbm [shape: f32[128,128], index: 3, kind: output, shape index: {}]
  %s4 = sld [smem:[#allocation0]]
  $region49: #{tpu_custom_call.1} parent=0
    _
  %s6 = ssub.s32 1, %s4
  %s7 = scalar_select 0, %s6, %s4
  $region1: #{tpu_custom_call.1} parent=0
    #allocation2 [shape = 'u8[16384]{0}', space=vmem, size = 0x4000, scoped, tag = 'input window, operand 0']
    #allocation3 [shape = 's32[2]{0}', space=sflag, size = 0x8, scoped, tag = 'scoped memory for tpu_custom_call.1']
    #allocation4 [shape = 's32[2]{0}', space=sflag, size = 0x8, scoped, tag = 'scoped memory for tpu_custom_call.1']
    #allocation5 [shape = 'u8[16384]{0}', space=vmem, size = 0x4000, scoped, tag = 'output window, operand 0']
    %8 = vsyncpa [#allocation3], 0
    %s9 = scalar_lea.sflag [#allocation3], 1
    %10 = vsyncpa %s9, 0
    %11 = vsyncpa [#allocation4], 0
    %s12 = scalar_lea.sflag [#allocation4], 1
    %13 = vsyncpa %s12, 0
    loop: start=0, step=1, limit=10
    $region2: #{tpu_custom_call.1} parent=1 // loop_pre_header
      _
    $region3: #{tpu_custom_call.1} parent=1 // loop_header
      %s15 = sphi 0, %s19
      %p16 = scmp.ge.s32.totalorder %s15, 10
      %s25 = sphi 0, %s27
      %s28 = sphi 0, %s25
      %s29 = sphi 0, %s28
      %s45 = sphi 0, %s29
      %s49 = sphi 0, %s49
      %s51 = sphi 0, %s49
      %s52 = sphi 0, %s51
      %s66 = sphi 0, %s52
      %s70 = sphi 0, %s70
      %s72 = sphi 0, %s70
      %s73 = sphi 0, %s72
      %s87 = sphi 0, %s73
      %s93 = sphi 0, %s95
      %s96 = sphi 0, %s93
      %s97 = sphi 0, %s96
      %s113 = sphi 0, %s97
    $region4: #{tpu_custom_call.1} parent=1 // loop_header_branch
      %18 = sbr.rel (%p16) target = $region8
    $region5: #{tpu_custom_call.1} parent=1 // loop_body
      %s20 = ssub.s32 %s15, 1
      %s21 = ssub.s32 %s15, 2
      %s22 = sadd.s32 %s15, 1
      %s23 = ssub.s32 %s15, %s22
      %p24 = scmp.eq.s32.totalorder %s23, 0
      %s26 = sadd.s32 %s25, 1
      %s27 = scalar_select %p24, %s25, %s26
      %p30 = pneg %p24
      %p31 = scmp.eq.s32.totalorder %s15, 7
      %p32 = por %p30, %p31
      %p33 = scmp.ne.s32.totalorder %s25, %s28
      %p34 = scmp.eq.s32.totalorder %s15, 0
      %p35 = por %p33, %p34
      %p36 = scmp.ne.s32.totalorder %s25, %s28
      %p37 = scmp.eq.s32.totalorder %s20, 7
      %p38 = por %p36, %p37
      %p39 = scmp.ne.s32.totalorder %s28, %s29
      %p40 = scmp.eq.s32.totalorder %s20, 0
      %p41 = por %p39, %p40
      %p42 = scmp.ne.s32.totalorder %s28, %s29
      %p43 = scmp.eq.s32.totalorder %s21, 7
      %p44 = por %p42, %p43
      %p46 = scmp.ne.s32.totalorder %s29, %s45
      %p47 = scmp.eq.s32.totalorder %s21, 0
      %p48 = por %p46, %p47
      %s50 = sadd.s32 %s49, 1
      %p53 = scmp.eq.s32.totalorder %s15, 7
      %p54 = scmp.ne.s32.totalorder %s49, %s51
      %p55 = scmp.eq.s32.totalorder %s15, 0
      %p56 = por %p54, %p55
      %p57 = scmp.ne.s32.totalorder %s49, %s51
      %p58 = scmp.eq.s32.totalorder %s20, 7
      %p59 = por %p57, %p58
      %p60 = scmp.ne.s32.totalorder %s51, %s52
      %p61 = scmp.eq.s32.totalorder %s20, 0
      %p62 = por %p60, %p61
      %p63 = scmp.ne.s32.totalorder %s51, %s52
      %p64 = scmp.eq.s32.totalorder %s21, 7
      %p65 = por %p63, %p64
      %p67 = scmp.ne.s32.totalorder %s52, %s66
      %p68 = scmp.eq.s32.totalorder %s21, 0
      %p69 = por %p67, %p68
      %s71 = sadd.s32 %s70, 1
      %p74 = scmp.eq.s32.totalorder %s15, 7
      %p75 = scmp.ne.s32.totalorder %s70, %s72
      %p76 = scmp.eq.s32.totalorder %s15, 0
      %p77 = por %p75, %p76
      %p78 = scmp.ne.s32.totalorder %s70, %s72
      %p79 = scmp.eq.s32.totalorder %s20, 7
      %p80 = por %p78, %p79
      %p81 = scmp.ne.s32.totalorder %s72, %s73
      %p82 = scmp.eq.s32.totalorder %s20, 0
      %p83 = por %p81, %p82
      %p84 = scmp.ne.s32.totalorder %s72, %s73
      %p85 = scmp.eq.s32.totalorder %s21, 7
      %p86 = por %p84, %p85
      %p88 = scmp.ne.s32.totalorder %s73, %s87
      %p89 = scmp.eq.s32.totalorder %s21, 0
      %p90 = por %p88, %p89
      %s91 = ssub.s32 %s15, %s22
      %p92 = scmp.eq.s32.totalorder %s91, 0
      %s94 = sadd.s32 %s93, 1
      %s95 = scalar_select %p92, %s93, %s94
      %p98 = pneg %p92
      %p99 = scmp.eq.s32.totalorder %s15, 7
      %p100 = por %p98, %p99
      %p101 = scmp.ne.s32.totalorder %s93, %s96
      %p102 = scmp.eq.s32.totalorder %s15, 0
      %p103 = por %p101, %p102
      %p104 = scmp.ne.s32.totalorder %s93, %s96
      %p105 = scmp.eq.s32.totalorder %s20, 7
      %p106 = por %p104, %p105
      %p107 = scmp.ne.s32.totalorder %s96, %s97
      %p108 = scmp.eq.s32.totalorder %s20, 0
      %p109 = por %p107, %p108
      %p110 = scmp.ne.s32.totalorder %s96, %s97
      %p111 = scmp.eq.s32.totalorder %s21, 7
      %p112 = por %p110, %p111
      %p114 = scmp.ne.s32.totalorder %s97, %s113
      %p115 = scmp.eq.s32.totalorder %s21, 0
      %p116 = por %p114, %p115
      %p117 = scmp.le.s32.totalorder 1, %s15
      %p118 = scmp.lt.s32.totalorder %s15, 9
      %p119 = pnand %p117, %p118
      %p120 = pneg %p119
      // Predicated region
      $region9: #{tpu_custom_call.1} parent=5 // pred_check
        _
      $region10: #{tpu_custom_call.1} parent=5 // pred_check_branch
        %122 = sbr.rel (%p119) target = $region12
      $region11: #{tpu_custom_call.1} parent=5 // pred_region
        %s123 = ssub.s32 %s15, 1
        // Predicated region
        $region13: #{tpu_custom_call.1} parent=11 // pred_check
          %p124 = pneg %p62
        $region14: #{tpu_custom_call.1} parent=11 // pred_check_branch
          %126 = sbr.rel (%p124) target = $region16
        $region15: #{tpu_custom_call.1} parent=11 // pred_region
          _
        $region16: #{tpu_custom_call.1} parent=11 // pred_fallthru
          _
        // Predicated region
        $region17: #{tpu_custom_call.1} parent=11 // pred_check
          %p127 = pneg %p83
        $region18: #{tpu_custom_call.1} parent=11 // pred_check_branch
          %129 = sbr.rel (%p127) target = $region20
        $region19: #{tpu_custom_call.1} parent=11 // pred_region
          _
        $region20: #{tpu_custom_call.1} parent=11 // pred_fallthru
          _
      $region12: #{tpu_custom_call.1} parent=5 // pred_fallthru
        _
      %p130 = scmp.lt.s32.totalorder %s15, 8
      // Predicated region
      $region21: #{tpu_custom_call.1} parent=5 // pred_check
        %p131 = pneg %p130
      $region22: #{tpu_custom_call.1} parent=5 // pred_check_branch
        %133 = sbr.rel (%p131) target = $region24
      $region23: #{tpu_custom_call.1} parent=5 // pred_region
        // Predicated region
        $region25: #{tpu_custom_call.1} parent=23 // pred_check
          %p134 = pneg %p35
        $region26: #{tpu_custom_call.1} parent=23 // pred_check_branch
          %136 = sbr.rel (%p134) target = $region28
        $region27: #{tpu_custom_call.1} parent=23 // pred_region
          %s137 = sand.u32 %s25, 1
          %s138 = scalar_lea.sflag [#allocation3], %s137
          %s139 = sand.u32 %s25, 1
          %s140 = smul.addr %s139, 16
          %s141 = scalar_lea.vmem [#allocation2], %s140
          %s142 = smul.u32 2, %s15
          %s144 = ssub.s32 256, 256
          %145 = vsyncadd %s138, %s144
          %s146 = smul.addr %s142, 128
          %s147 = scalar_lea.hbm %s0, %s146
          %s148 = sshll.u32 %s141, 4
          %s149 = int_to_ptr.vmem [resolvable:$true] %s148
          %154 = dma.hbm_to_vmem [thread:$0]  %s147, 256, %s149, %s138, 128, 128, 8
        $region28: #{tpu_custom_call.1} parent=23 // pred_fallthru
          _
      $region24: #{tpu_custom_call.1} parent=5 // pred_fallthru
        _
      %p155 = scmp.le.s32.totalorder 1, %s15
      %p156 = scmp.lt.s32.totalorder %s15, 9
      %p157 = pnand %p155, %p156
      %p158 = pneg %p157
      // Predicated region
      $region29: #{tpu_custom_call.1} parent=5 // pred_check
        _
      $region30: #{tpu_custom_call.1} parent=5 // pred_check_branch
        %160 = sbr.rel (%p157) target = $region32
      $region31: #{tpu_custom_call.1} parent=5 // pred_region
        %s161 = ssub.s32 %s15, 1
        %s162 = sand.u32 %s28, 1
        %s163 = scalar_lea.sflag [#allocation3], %s162
        %s164 = sand.u32 %s28, 1
        %s165 = smul.addr %s164, 16
        %s166 = scalar_lea.vmem [#allocation2], %s165
        // Predicated region
        $region33: #{tpu_custom_call.1} parent=31 // pred_check
          %p167 = pneg %p41
        $region34: #{tpu_custom_call.1} parent=31 // pred_check_branch
          %169 = sbr.rel (%p167) target = $region36
        $region35: #{tpu_custom_call.1} parent=31 // pred_region
          %170 = dma.done %s163, 256
        $region36: #{tpu_custom_call.1} parent=31 // pred_fallthru
          _
        %s171 = sand.u32 %s28, 1
        %s172 = scalar_lea.sflag [#allocation3], %s171
        %s173 = sand.u32 %s28, 1
        %s174 = smul.addr %s173, 16
        %s175 = scalar_lea.vmem [#allocation2], %s174
        %p176 = pneg %p41
        %p177 = pneg %p38
        %p178 = pneg %p62
        %p179 = pneg %p59
        %p180 = pneg %p83
        %p181 = pneg %p80
        %p182 = pneg %p109
        %p183 = pneg %p106
        %s184 = sand.u32 %s96, 1
        %s185 = scalar_lea.sflag [#allocation4], %s184
        %s186 = sand.u32 %s96, 1
        %s187 = smul.addr %s186, 16
        %s188 = scalar_lea.vmem [#allocation5], %s187
        %s189 = smul.u32 2, %s20
        %s190 = smul.u32 2, %s20
        %v191 = vld [vmem:[%s166] sm:$0xff]
        %v192 = vld [vmem:[%s166 + $0x8] sm:$0xff]
        %v193 = vld [vmem:[%s1] sm:$0x1]
        %v195 = vlaneseq
        %v196 = vshrl.u32 %v195, 7
        %v197 = vsub.s32 0, %v196
        %v198 = vrot.slane %v193, %v197
        %v200 = vmul.f32 %v191, %v198
        %v201 = vmul.f32 %v192, %v198
        %v202 = vld [vmem:[%s2] sm:$0x1]
        %v204 = vlaneseq
        %v205 = vshrl.u32 %v204, 7
        %v206 = vsub.s32 0, %v205
        %v207 = vrot.slane %v202, %v206
        %v209 = vadd.f32 %v200, %v207
        %v210 = vadd.f32 %v201, %v207
        %211 = vst [vmem:[%s188] sm:$0xff] %v209
        %212 = vst [vmem:[%s188 + $0x8] sm:$0xff] %v210
        %s213 = sand.u32 %s96, 1
        %s214 = scalar_lea.sflag [#allocation4], %s213
        %s215 = sand.u32 %s96, 1
        %s216 = smul.addr %s215, 16
        %s217 = scalar_lea.vmem [#allocation5], %s216
        // Predicated region
        $region37: #{tpu_custom_call.1} parent=31 // pred_check
          %p218 = pneg %p106
        $region38: #{tpu_custom_call.1} parent=31 // pred_check_branch
          %220 = sbr.rel (%p218) target = $region40
        $region39: #{tpu_custom_call.1} parent=31 // pred_region
          %s221 = smul.u32 2, %s20
          %s223 = ssub.s32 256, 256
          %224 = vsyncadd %s214, %s223
          %s225 = smul.addr %s221, 128
          %s226 = scalar_lea.hbm %s3, %s225
          %s227 = sshll.u32 %s217, 4
          %s228 = int_to_ptr.vmem [resolvable:$true] %s227
          %233 = dma.vmem_to_hbm [thread:$0]  %s228, 256, %s226, %s214, 128, 128, 8
        $region40: #{tpu_custom_call.1} parent=31 // pred_fallthru
          _
      $region32: #{tpu_custom_call.1} parent=5 // pred_fallthru
        _
      %p234 = scmp.le.s32.totalorder 2, %s15
      // Predicated region
      $region41: #{tpu_custom_call.1} parent=5 // pred_check
        %p235 = pneg %p234
      $region42: #{tpu_custom_call.1} parent=5 // pred_check_branch
        %237 = sbr.rel (%p235) target = $region44
      $region43: #{tpu_custom_call.1} parent=5 // pred_region
        %s238 = ssub.s32 %s15, 2
        // Predicated region
        $region45: #{tpu_custom_call.1} parent=43 // pred_check
          %p239 = pneg %p112
        $region46: #{tpu_custom_call.1} parent=43 // pred_check_branch
          %241 = sbr.rel (%p239) target = $region48
        $region47: #{tpu_custom_call.1} parent=43 // pred_region
          %s242 = sand.u32 %s97, 1
          %s243 = scalar_lea.sflag [#allocation4], %s242
          %s244 = sand.u32 %s97, 1
          %s245 = smul.addr %s244, 16
          %s246 = scalar_lea.vmem [#allocation5], %s245
          %247 = dma.done %s243, 256
        $region48: #{tpu_custom_call.1} parent=43 // pred_fallthru
          _
      $region44: #{tpu_custom_call.1} parent=5 // pred_fallthru
        _
    $region6: #{tpu_custom_call.1} parent=1 // loop_footer
      %s19 = sadd.s32 1, %s15
    $region7: #{tpu_custom_call.1} parent=1 // loop_footer_branch
      %14 = sbr.rel target = $region3
    $region8: #{tpu_custom_call.1} parent=1 // loop_exit
      _
    %248 = vsyncpa [#allocation3], 1
    %s249 = scalar_lea.sflag [#allocation3], 1
    %250 = vsyncpa %s249, 1
    %251 = vsyncpa [#allocation4], 1
    %s252 = scalar_lea.sflag [#allocation4], 1
    %253 = vsyncpa %s252, 1

</llo_original>
